<compile_context>
chip_gen: v7x
topology: tpu7x:2x2x1
jax: 0.10.0
libtpu: 0.0.40
codegen_flags: <defaults>
</compile_context>

<pallas_src>
import functools

import jax
import jax.numpy as jnp
from jax import lax
from jax.experimental import pallas as pl
from jax.experimental.pallas import tpu as pltpu

_LANES = 128                            # vreg lane width: last dim of every block
_TARGET_BLOCK_BYTES = 4 * 1024 * 1024   # ~4 MiB of input bytes per block per step
_VMEM_LIMIT_BYTES = 40 * 1024 * 1024    # 2 in x 2 buf x 4 MiB + f32 temps + headroom


def _num_tensorcores():
    """TensorCores a single Pallas kernel can shard a 'parallel' grid axis across."""
    try:
        kind = jax.devices()[0].device_kind.lower()
    except Exception:
        return 1
    # v4 / v5p (megacore) and v7x expose 2 TCs per device; v5e / v6e expose 1.
    if any(tag in kind for tag in ("v7", "7x", "v4", "v5p")):
        return 2
    return 1


def _mse_kernel(rows, steps, total_blocks, mask_rows,
                yt_ref, yp_ref, out_ref, acc_ref):
    """Per-core partial sum of (yt - yp)^2 over its range of row tiles.

    acc_ref is a single-vreg (8, 128) f32 accumulator; every step folds its
    (block_rows, 128) tile of squared diffs into it with vreg-aligned VALU adds.
    The cross-lane reduction is paid exactly once per core, on the last step.
    """
    c = pl.program_id(0)   # core / partial-sum slot
    i = pl.program_id(1)   # row-tile step within this core
    block_rows = yt_ref.shape[0]

    @pl.when(i == 0)
    def _():
        acc_ref[...] = jnp.zeros_like(acc_ref)

    def accumulate(apply_row_mask):
        d = yt_ref[...].astype(jnp.float32) - yp_ref[...].astype(jnp.float32)
        dd = d * d
        if apply_row_mask:
            # Rows past the logical end of the flattened input (tail rows and
            # the unspecified padding of the partial edge tile) contribute 0.
            g = c * steps + i
            row_ids = (g * block_rows +
                       lax.broadcasted_iota(jnp.int32, (block_rows, 1), 0))
            dd = jnp.where(row_ids < rows, dd, 0.0)
        if block_rows % 8 == 0:
            # Vreg-aligned fold: no cross-lane/cross-sublane work, pure VALU.
            acc_ref[...] += jnp.sum(
                dd.reshape(block_rows // 8, 8, _LANES), axis=0)
        else:
            # Only possible when the whole input is one small full-extent block:
            # pay a single cross-sublane reduce into row 0 of the accumulator.
            acc_ref[0:1, :] += jnp.sum(dd, axis=0, keepdims=True)

    if mask_rows:  # static Python bool -- emitted only when coverage > rows
        g = c * steps + i
        last = total_blocks - 1

        @pl.when(g < last)        # steady state: real, fully populated blocks
        def _():
            accumulate(apply_row_mask=False)

        @pl.when(g == last)       # the only block that can hold tail rows
        def _():
            accumulate(apply_row_mask=True)
        # g > last: phantom block of the core split -> skip accumulation
        # entirely (its clamped re-read is wasted DMA but never contributes).
    else:
        accumulate(apply_row_mask=False)

    @pl.when(i == steps - 1)
    def _():
        out_ref[0, 0] = jnp.sum(acc_ref[...])


def waypoint_mse(y_true, y_pred, *, min_kernel_elems=16 * 1024):
    """Pallas implementation of torch.mean((y_true - y_pred) ** 2)."""
    assert y_true.shape == y_pred.shape, "y_true / y_pred must match"
    n = y_true.size
    assert n > 0

    def _jnp_mse(a, b):
        d = a.astype(jnp.float32) - b.astype(jnp.float32)
        return jnp.mean(d * d)

    # Small-input fallback: XLA's fused elementwise+reduce beats kernel launch
    # overhead for tiny waypoint tensors (and n < 128 has no full lane row).
    if n < max(min_kernel_elems, _LANES):
        return _jnp_mse(y_true, y_pred)

    yt = y_true.reshape(-1)
    yp = y_pred.reshape(-1)

    # Tail handling WITHOUT a full-array pad: the <=127 trailing elements are
    # reduced with a tiny jnp expression and added to the kernel partial sum.
    rows = n // _LANES
    n_main = rows * _LANES
    rem = n - n_main
    if rem:
        tt = lax.dynamic_slice(yt, (n_main,), (rem,)).astype(jnp.float32)
        tp = lax.dynamic_slice(yp, (n_main,), (rem,)).astype(jnp.float32)
        td = tt - tp
        tail_sum = jnp.sum(td * td)
        yt = yt[:n_main]
        yp = yp[:n_main]
    else:
        tail_sum = jnp.float32(0.0)

    yt = yt.reshape(rows, _LANES)
    yp = yp.reshape(rows, _LANES)

    # Dtype-aware block size: ~_TARGET_BLOCK_BYTES of input bytes per block so
    # the per-step DMA window stays well above the fixed grid-step overhead
    # (8192 rows for f32, 16384 for bf16 -- always a multiple of 8 sublanes).
    itemsize = jnp.dtype(y_true.dtype).itemsize
    rows_per_tile = max(8, (_TARGET_BLOCK_BYTES // (_LANES * itemsize)) // 8 * 8)
    if rows <= rows_per_tile:
        block_rows = rows            # single block == full array extent (always legal)
    else:
        block_rows = rows_per_tile   # multiple of 8 sublanes

    total_blocks = -(-rows // block_rows)
    ncores = _num_tensorcores() if total_blocks > 1 else 1
    steps = -(-total_blocks // ncores)
    covered_rows = ncores * steps * block_rows
    mask_rows = covered_rows != rows   # static: tail rows / phantom blocks present

    def _in_map(c, i):
        # Clamp phantom blocks (grid over-coverage) onto the last real block;
        # their contribution is skipped inside the kernel.
        g = c * steps + i
        return (jnp.minimum(g, total_blocks - 1), 0)

    in_spec = pl.BlockSpec((block_rows, _LANES), _in_map)

    partials = pl.pallas_call(
        functools.partial(_mse_kernel, rows, steps, total_blocks, mask_rows),
        out_shape=jax.ShapeDtypeStruct((ncores, 1), jnp.float32),
        grid_spec=pltpu.PrefetchScalarGridSpec(
            num_scalar_prefetch=0,
            grid=(ncores, steps),
            in_specs=[in_spec, in_spec],
            out_specs=pl.BlockSpec((1, 1), lambda c, i: (c, 0),
                                   memory_space=pltpu.SMEM),
            scratch_shapes=[pltpu.VMEM((8, _LANES), jnp.float32)],
        ),
        compiler_params=pltpu.CompilerParams(
            dimension_semantics=("parallel", "arbitrary"),
            vmem_limit_bytes=_VMEM_LIMIT_BYTES),
        cost_estimate=pl.CostEstimate(
            flops=3 * n,
            transcendentals=0,
            bytes_accessed=2 * n_main * itemsize + 4 * ncores),
    )(yt, yp)

    return (jnp.sum(partials) + tail_sum) / jnp.float32(n)


if __name__ == "__main__":
    key = jax.random.PRNGKey(0)

    # (2, 8, 2)       : tiny waypoint demo -> jnp fallback (n < 128)
    # (4, 96, 2)      : n % 128 == 0, rows=6 (not a multiple of 8), single block
    # (3, 1000, 3)    : rem=40 tail path, rows=70, single block
    # (512, 640, 2)   : rows=5120, one big vreg-aligned block
    # (1024, 1030, 2) : rows=16480 -> multi-block, gated edge-row mask,
    #                   phantom-block skip on 2-TC chips
    shapes = [(2, 8, 2), (4, 96, 2), (3, 1000, 3), (512, 640, 2), (1024, 1030, 2)]

    for shape in shapes:
        key, k1, k2 = jax.random.split(key, 3)
        y_true = jax.random.normal(k1, shape, dtype=jnp.float32)
        y_pred = jax.random.normal(k2, shape, dtype=jnp.float32)

        # min_kernel_elems=0 forces the Pallas path wherever a lane row exists.
        loss = jax.block_until_ready(waypoint_mse(y_true, y_pred, min_kernel_elems=0))

        ref = jnp.mean((y_true - y_pred) ** 2)
        assert jnp.allclose(loss, ref, rtol=5e-5, atol=1e-6), (shape, loss, ref)

    print("KERNEL_OK")
</pallas_src>

<mosaic_0001>
module attributes {stable_mosaic.version = 11 : i64} {
  func.func @_mse_kernel(%arg0: i32, %arg1: i32, %arg2: memref<6x128xf32, #tpu.memory_space<vmem>>, %arg3: memref<6x128xf32, #tpu.memory_space<vmem>>, %arg4: memref<1x1xf32, #tpu.memory_space<smem>>, %arg5: memref<8x128xf32, #tpu.memory_space<vmem>>) attributes {dimension_semantics = [#tpu.dimension_semantics<parallel>, #tpu.dimension_semantics<arbitrary>], iteration_bounds = array<i64: 1, 1>, scalar_prefetch = 0 : i64, scratch_operands = 1 : i64, tpu.core_type = #tpu.core_type<tc>, window_params = [{transform_indices = @transform_0, window_bounds = array<i64: 6, 128>}, {transform_indices = @transform_1, window_bounds = array<i64: 6, 128>}, {transform_indices = @transform_2, window_bounds = array<i64: 1, 1>}]} {
    %c0_i32 = arith.constant 0 : i32
    %0 = arith.cmpi eq, %arg1, %c0_i32 : i32
    %1 = arith.extui %0 : i1 to i32
    %c0_i32_0 = arith.constant 0 : i32
    %2 = arith.cmpi ne, %1, %c0_i32_0 : i32
    scf.if %2 {
      %cst_10 = arith.constant 0.000000e+00 : f32
      %15 = vector.broadcast %cst_10 : f32 to vector<8x128xf32>
      %c0_11 = arith.constant 0 : index
      %c0_12 = arith.constant 0 : index
      %16 = vector.load %arg5[%c0_11, %c0_12] : memref<8x128xf32, #tpu.memory_space<vmem>>, vector<8x128xf32>
      tpu.vector_store %arg5[%c0_11, %c0_12], %15 {strides = array<i32>} : memref<8x128xf32, #tpu.memory_space<vmem>>, vector<8x128xf32>,
    } else {
    }
    %c0 = arith.constant 0 : index
    %c0_1 = arith.constant 0 : index
    %3 = vector.load %arg2[%c0, %c0_1] : memref<6x128xf32, #tpu.memory_space<vmem>>, vector<6x128xf32>
    %c0_2 = arith.constant 0 : index
    %c0_3 = arith.constant 0 : index
    %4 = vector.load %arg3[%c0_2, %c0_3] : memref<6x128xf32, #tpu.memory_space<vmem>>, vector<6x128xf32>
    %5 = arith.subf %3, %4 : vector<6x128xf32>
    %6 = arith.mulf %5, %5 : vector<6x128xf32>
    %c0_4 = arith.constant 0 : index
    %c0_5 = arith.constant 0 : index
    %7 = vector.load %arg5[%c0_4, %c0_5] : memref<8x128xf32, #tpu.memory_space<vmem>>, vector<1x128xf32>
    %cst = arith.constant dense<0.000000e+00> : vector<128xf32>
    %8 = vector.multi_reduction <add>, %6, %cst [0] : vector<6x128xf32> to vector<128xf32>
    %9 = vector.shape_cast %8 : vector<128xf32> to vector<1x128xf32>
    %10 = arith.addf %7, %9 : vector<1x128xf32>
    %c0_6 = arith.constant 0 : index
    %c0_7 = arith.constant 0 : index
    %11 = vector.load %arg5[%c0_6, %c0_7] : memref<8x128xf32, #tpu.memory_space<vmem>>, vector<1x128xf32>
    tpu.vector_store %arg5[%c0_6, %c0_7], %10 {strides = array<i32>} : memref<8x128xf32, #tpu.memory_space<vmem>>, vector<1x128xf32>,
    %c0_i32_8 = arith.constant 0 : i32
    %12 = arith.cmpi eq, %arg1, %c0_i32_8 : i32
    %13 = arith.extui %12 : i1 to i32
    %c0_i32_9 = arith.constant 0 : i32
    %14 = arith.cmpi ne, %13, %c0_i32_9 : i32
    scf.if %14 {
      %c0_10 = arith.constant 0 : index
      %c0_11 = arith.constant 0 : index
      %15 = vector.load %arg5[%c0_10, %c0_11] : memref<8x128xf32, #tpu.memory_space<vmem>>, vector<8x128xf32>
      %16 = vector.shape_cast %15 : vector<8x128xf32> to vector<1x8x128xf32>
      %cst_12 = arith.constant dense<0.000000e+00> : vector<1xf32>
      %17 = vector.multi_reduction <add>, %16, %cst_12 [1, 2] : vector<1x8x128xf32> to vector<1xf32>
      %18 = vector.shape_cast %17 : vector<1xf32> to vector<1x1x1xf32>
      %19 = vector.extract %18[0, 0, 0] : f32 from vector<1x1x1xf32>
      %c0_13 = arith.constant 0 : index
      %c0_14 = arith.constant 0 : index
      %20 = memref.load %arg4[%c0_13, %c0_14] : memref<1x1xf32, #tpu.memory_space<smem>>
      memref.store %19, %arg4[%c0_13, %c0_14] : memref<1x1xf32, #tpu.memory_space<smem>>
    } else {
    }
    return
  }
  func.func @transform_0(%arg0: i32, %arg1: i32) -> (i32, i32) {
    %c1_i32 = arith.constant 1 : i32
    %0 = arith.muli %arg0, %c1_i32 : i32
    %1 = arith.addi %0, %arg1 : i32
    %c0_i32 = arith.constant 0 : i32
    %2 = arith.minsi %1, %c0_i32 : i32
    %c0_i32_0 = arith.constant 0 : i32
    %c0_i32_1 = arith.constant 0 : i32
    return %2, %c0_i32_0 : i32, i32
  }
  func.func @transform_1(%arg0: i32, %arg1: i32) -> (i32, i32) {
    %c1_i32 = arith.constant 1 : i32
    %0 = arith.muli %arg0, %c1_i32 : i32
    %1 = arith.addi %0, %arg1 : i32
    %c0_i32 = arith.constant 0 : i32
    %2 = arith.minsi %1, %c0_i32 : i32
    %c0_i32_0 = arith.constant 0 : i32
    %c0_i32_1 = arith.constant 0 : i32
    return %2, %c0_i32_0 : i32, i32
  }
  func.func @transform_2(%arg0: i32, %arg1: i32) -> (i32, i32) {
    %c0_i32 = arith.constant 0 : i32
    %c0_i32_0 = arith.constant 0 : i32
    return %arg0, %c0_i32 : i32, i32
  }
}

</mosaic_0001>

<llo_original>
// kernel: tpu_custom_call.1
$region0: #{tpu_custom_call.1}
  #allocation0 [shape = 'u32[]', space=smem, size = 0x4, offset = 0x4, fixed_abs, tag = 'smem constant byte address 0x4 - core index']
  #allocation1 [shape = 'u32[144,128]{1,0:T(1,128)}', space=vmem, size = 0x12000, scoped, tag = 'internal scratch']
  #allocation2 [shape = 'f32[8,128]{1,0:T(8,128)}', space=vmem, size = 0x1000, scoped, tag = 'scratch operand']
  %s0 = inlined_call_operand.hbm [shape: f32[6,128], index: 0, kind: input, shape index: {}]
  %s1 = inlined_call_operand.hbm [shape: f32[6,128], index: 1, kind: input, shape index: {}]
  %s2 = inlined_call_operand.hbm [shape: f32[1,1], index: 2, kind: output, shape index: {}]
  %s3 = sld [smem:[#allocation0]]
  $region34: #{tpu_custom_call.1} parent=0
    _
  %s5 = ssub.s32 1, %s3
  %s6 = scalar_select 0, %s5, %s3
  $region1: #{tpu_custom_call.1} parent=0
    #allocation3 [shape = 'u8[4096]{0}', space=vmem, size = 0x1000, scoped, tag = 'input window, operand 0, single buffered']
    #allocation4 [shape = 's32[1]{0}', space=sflag, size = 0x4, scoped, tag = 'scoped memory for tpu_custom_call.1']
    #allocation5 [shape = 's32[1]{0}', space=sflag, size = 0x4, scoped, tag = 'scoped memory for tpu_custom_call.1']
    #allocation6 [shape = 'u8[4096]{0}', space=vmem, size = 0x1000, scoped, tag = 'input window, operand 1, single buffered']
    #allocation7 [shape = 's32[1]{0}', space=sflag, size = 0x4, scoped, tag = 'scoped memory for tpu_custom_call.1']
    #allocation8 [shape = 'u8[512]{0}', space=smem, size = 0x200, scoped, tag = 'output window, operand 0, single buffered']
    %7 = vsyncpa [#allocation4], 0
    %8 = vsyncpa [#allocation7], 0
    %9 = vsyncpa [#allocation5], 0
    // Predicated region
    $region2: #{tpu_custom_call.1} parent=1 // pred_check
      _
    $region3: #{tpu_custom_call.1} parent=1 // pred_check_branch
      %11 = sbr.rel (0) target = $region5
    $region4: #{tpu_custom_call.1} parent=1 // pred_region
      %s12 = sadd.s32 0, 0
      %p13 = scmp.lt.s32.totalorder %s12, 0
      %s14 = scalar_select %p13, %s12, 0
      %s16 = ssub.s32 128, 128
      %17 = vsyncadd [#allocation4], %s16
      %s18 = smul.addr %s14, 128
      %s19 = scalar_lea.hbm %s0, %s18
      %s21 = sshll.u32 [#allocation3], 4
      %s22 = int_to_ptr.vmem [resolvable:$true] %s21
      %24 = dma.hbm_to_vmem [thread:$0]  %s19, 128, %s22, [#allocation4]
    $region5: #{tpu_custom_call.1} parent=1 // pred_fallthru
      _
    // Predicated region
    $region6: #{tpu_custom_call.1} parent=1 // pred_check
      _
    $region7: #{tpu_custom_call.1} parent=1 // pred_check_branch
      %26 = sbr.rel (0) target = $region9
    $region8: #{tpu_custom_call.1} parent=1 // pred_region
      %s27 = sadd.s32 0, 0
      %p28 = scmp.lt.s32.totalorder %s27, 0
      %s29 = scalar_select %p28, %s27, 0
      %s31 = ssub.s32 128, 128
      %32 = vsyncadd [#allocation7], %s31
      %s33 = smul.addr %s29, 128
      %s34 = scalar_lea.hbm %s1, %s33
      %s36 = sshll.u32 [#allocation6], 4
      %s37 = int_to_ptr.vmem [resolvable:$true] %s36
      %39 = dma.hbm_to_vmem [thread:$0]  %s34, 128, %s37, [#allocation7]
    $region9: #{tpu_custom_call.1} parent=1 // pred_fallthru
      _
    // Predicated region
    $region10: #{tpu_custom_call.1} parent=1 // pred_check
      _
    $region11: #{tpu_custom_call.1} parent=1 // pred_check_branch
      %41 = sbr.rel (0) target = $region13
    $region12: #{tpu_custom_call.1} parent=1 // pred_region
      %42 = dma.done [#allocation4], 128
    $region13: #{tpu_custom_call.1} parent=1 // pred_fallthru
      _
    // Predicated region
    $region14: #{tpu_custom_call.1} parent=1 // pred_check
      _
    $region15: #{tpu_custom_call.1} parent=1 // pred_check_branch
      %44 = sbr.rel (0) target = $region17
    $region16: #{tpu_custom_call.1} parent=1 // pred_region
      %45 = dma.done [#allocation7], 128
    $region17: #{tpu_custom_call.1} parent=1 // pred_fallthru
      _
    %s46 = sadd.s32 0, 0
    %p47 = scmp.lt.s32.totalorder %s46, 0
    %s48 = scalar_select %p47, %s46, 0
    %s49 = sadd.s32 0, 0
    %p50 = scmp.lt.s32.totalorder %s49, 0
    %s51 = scalar_select %p50, %s49, 0
    %p52 = scmp.eq.s32.totalorder 0, 0
    // Predicated region
    $region18: #{tpu_custom_call.1} parent=1 // pred_check
      %p53 = pneg %p52
    $region19: #{tpu_custom_call.1} parent=1 // pred_check_branch
      %55 = sbr.rel (%p53) target = $region21
    $region20: #{tpu_custom_call.1} parent=1 // pred_region
      %56 = vst [vmem:[#allocation2] sm:$0xff] 0.0
    $region21: #{tpu_custom_call.1} parent=1 // pred_fallthru
      _
    %v57 = vld [vmem:[#allocation3] sm:$0x3f]
    %v58 = vld [vmem:[#allocation6] sm:$0x3f]
    %v59 = vsub.f32 %v57, %v58
    %v60 = vmul.f32 %v59, %v59
    %v61 = vld [vmem:[#allocation2] sm:$0x1]
    %vm62 = vcmask 1045504
    %v63 = vsel %vm62, %v60, 0.0
    %v64 = vrot.slane %v63, 4
    %v65 = vadd.f32 %v63, %v64
    %v66 = vrot.slane %v65, 2
    %v67 = vadd.f32 %v65, %v66
    %v68 = vrot.slane %v67, 1
    %v69 = vadd.f32 %v67, %v68
    %v70 = vadd.f32 %v61, %v69
    %71 = vst [vmem:[#allocation2] sm:$0x1] %v70
    // Predicated region
    $region22: #{tpu_custom_call.1} parent=1 // pred_check
      %p72 = pneg %p52
    $region23: #{tpu_custom_call.1} parent=1 // pred_check_branch
      %74 = sbr.rel (%p72) target = $region25
    $region24: #{tpu_custom_call.1} parent=1 // pred_region
      %v75 = vld [vmem:[#allocation2] sm:$0xff]
      %76 = vadd.xlane.f32.xlu0 %v75
      %v77 = vpop.xlane.xlu0 %76
      %v78 = vrot.slane %v77, 4
      %v79 = vadd.f32 %v77, %v78
      %v80 = vrot.slane %v79, 2
      %v81 = vadd.f32 %v79, %v80
      %v82 = vrot.slane %v81, 1
      %v83 = vadd.f32 %v81, %v82
      %s84 = vtos %v83
      %s85 = scalar_lea.smem [#allocation8], 0
      %86 = sst [smem:[%s85]] %s84
    $region25: #{tpu_custom_call.1} parent=1 // pred_fallthru
      _
    // Predicated region
    $region26: #{tpu_custom_call.1} parent=1 // pred_check
      _
    $region27: #{tpu_custom_call.1} parent=1 // pred_check_branch
      %88 = sbr.rel (0) target = $region29
    $region28: #{tpu_custom_call.1} parent=1 // pred_region
      %s90 = ssub.s32 16, 16
      %91 = vsyncadd [#allocation5], %s90
      %94 = dma.smem_to_hbm [#allocation8], 16, %s2, [#allocation5]
    $region29: #{tpu_custom_call.1} parent=1 // pred_fallthru
      _
    // Predicated region
    $region30: #{tpu_custom_call.1} parent=1 // pred_check
      _
    $region31: #{tpu_custom_call.1} parent=1 // pred_check_branch
      %96 = sbr.rel (0) target = $region33
    $region32: #{tpu_custom_call.1} parent=1 // pred_region
      %97 = dma.done [#allocation5], 16
    $region33: #{tpu_custom_call.1} parent=1 // pred_fallthru
      _
    %98 = sfence
    %99 = vsyncpa [#allocation4], 1
    %100 = vsyncpa [#allocation7], 1
    %101 = vsyncpa [#allocation5], 1

</llo_original>
